<compile_context>
chip_gen: v6e
topology: v6e:2x2x1
jax: 0.10.0
libtpu: 0.0.40
codegen_flags: <defaults>
</compile_context>

<pallas_src>
import math
from functools import partial

import numpy as np
import jax
import jax.numpy as jnp
from jax.experimental import pallas as pl
from jax.experimental.pallas import tpu as pltpu


# ---------------------------------------------------------------------------
# Kernels
# ---------------------------------------------------------------------------
def _ws_kernel(*refs, has_bias):
    """Weight-stationary (full-K) step: one MXU dot per (N, M) grid point.

    refs: x(bm,K), w(K,bn), [b(1,bn)], o(bm,bn)
    """
    if has_bias:
        x_ref, w_ref, b_ref, o_ref = refs
    else:
        x_ref, w_ref, o_ref = refs
    acc = jnp.dot(x_ref[...], w_ref[...], preferred_element_type=jnp.float32)
    if has_bias:
        acc = acc + b_ref[...].astype(jnp.float32)
    o_ref[...] = acc.astype(o_ref.dtype)


def _kstream_kernel(*refs, has_bias, use_scratch):
    """K-streamed step on a (M, N, K) grid with f32 accumulation.

    refs: x(bm,bk), w(bk,bn), [b(1,bn)], o(bm,bn), [acc(bm,bn) f32 scratch]
    When the output dtype is f32 we accumulate directly into o_ref (its block
    index is constant across k) and drop the scratch + final copy.
    """
    if has_bias:
        if use_scratch:
            x_ref, w_ref, b_ref, o_ref, acc_ref = refs
        else:
            x_ref, w_ref, b_ref, o_ref = refs
            acc_ref = o_ref
    else:
        if use_scratch:
            x_ref, w_ref, o_ref, acc_ref = refs
        else:
            x_ref, w_ref, o_ref = refs
            acc_ref = o_ref

    k = pl.program_id(2)

    @pl.when(k == 0)
    def _():
        if has_bias:
            acc_ref[...] = jnp.broadcast_to(
                b_ref[...].astype(jnp.float32), acc_ref.shape)
        else:
            acc_ref[...] = jnp.zeros_like(acc_ref)

    acc_ref[...] += jnp.dot(x_ref[...], w_ref[...],
                            preferred_element_type=jnp.float32)

    if use_scratch:
        @pl.when(k == pl.num_programs(2) - 1)
        def _():
            o_ref[...] = acc_ref[...].astype(o_ref.dtype)


# ---------------------------------------------------------------------------
# Helpers
# ---------------------------------------------------------------------------
def _round_up(x: int, m: int) -> int:
    return ((x + m - 1) // m) * m


def _pad2d(a, rows: int, cols: int):
    pr, pc = rows - a.shape[0], cols - a.shape[1]
    if pr or pc:
        a = jnp.pad(a, ((0, pr), (0, pc)))
    return a


def prepare_params(weight, bias, mxu_input_dtype=jnp.bfloat16):
    """One-time (param-load-time) prep: transpose the PyTorch (out, in) weight
    to (in, out) = (d_model, heads*d_k) and pre-cast it to the MXU feed dtype.
    Bias stays f32 (it is folded into the f32 accumulator)."""
    w_kn = jnp.asarray(weight).T
    if mxu_input_dtype is not None:
        w_kn = w_kn.astype(mxu_input_dtype)
    b = None if bias is None else jnp.asarray(bias).astype(jnp.float32)
    return w_kn, b


# ---------------------------------------------------------------------------
# Wrapper
# ---------------------------------------------------------------------------
def prepare_for_mha(x, weight_kn, bias, heads, d_k, *,
                    tm=512, tn=512, tk=1024,
                    mxu_input_dtype=jnp.bfloat16,
                    ws_vmem_budget=24 << 20):
    """Pallas equivalent of PrepareForMultiHeadAttention.forward.

    Args:
      x:         (seq_len, batch, d_model)
      weight_kn: (d_model, heads*d_k) — pre-transposed (use prepare_params()
                 on the PyTorch (out, in) weight).
      bias:      (heads*d_k,) f32, or None.
      heads, d_k: ints.
      mxu_input_dtype: MXU feed dtype (default bf16; accumulation stays f32).
                 Pass None to feed the MXU in x's dtype.
    Returns:
      (seq_len, batch, heads, d_k), dtype of x.
    """
    seq_len, batch, d_model = x.shape
    n_out = heads * d_k
    assert weight_kn.shape == (d_model, n_out), (
        "weight must be pre-transposed to (d_model, heads*d_k); "
        "use prepare_params() on the PyTorch (out, in) weight")

    out_dtype = np.dtype(x.dtype)
    in_dtype = np.dtype(mxu_input_dtype) if mxu_input_dtype is not None else out_dtype

    x2d = x.reshape(seq_len * batch, d_model)
    if x2d.dtype != in_dtype:
        x2d = x2d.astype(in_dtype)
    if weight_kn.dtype != in_dtype:
        weight_kn = weight_kn.astype(in_dtype)   # no-op if prepare_params pre-cast

    M, K, N = seq_len * batch, d_model, n_out
    in_bytes = int(in_dtype.itemsize)
    out_bytes = int(out_dtype.itemsize)

    # ---- tile sizes -------------------------------------------------------
    # Lane dims (N, K) tiles are multiples of 128; M tile is a multiple of 16
    # for sub-32-bit MXU feed (sublane packing), 8 otherwise.  Arrays are
    # zero-padded up to tile multiples (M/N padding is sliced off; zero K
    # padding contributes nothing to the accumulation).
    align_m = 16 if in_bytes < 4 else 8
    bm = min(tm, _round_up(M, align_m))
    bn = min(tn, _round_up(N, 128))
    K_full = _round_up(K, 128)

    M_pad = _round_up(M, bm)
    N_pad = _round_up(N, bn)

    has_bias = bias is not None
    if has_bias:
        b2d = _pad2d(bias.reshape(1, N).astype(jnp.float32), 1, N_pad)

    # Weight-stationary (full-K, 2-D grid) if the full-K working set fits.
    ws_need = (2 * bm * K_full * in_bytes        # x blocks (double-buffered)
               + 2 * K_full * bn * in_bytes      # w blocks
               + 2 * bm * bn * out_bytes         # out blocks
               + 8 * bn * 4)                     # bias
    use_ws = ws_need <= ws_vmem_budget

    if use_ws:
        # grid = (N tiles, M tiles): M is the inner axis, so the weight block
        # index (0, j) is constant across consecutive steps -> W is DMA'd once
        # per N-tile (weight HBM traffic N*K instead of (M/bm)*N*K).
        x_p = _pad2d(x2d, M_pad, K_full)
        w_p = _pad2d(weight_kn, K_full, N_pad)
        grid = (N_pad // bn, M_pad // bm)
        in_specs = [pl.BlockSpec((bm, K_full), lambda j, i: (i, 0)),
                    pl.BlockSpec((K_full, bn), lambda j, i: (0, j))]
        operands = [x_p, w_p]
        if has_bias:
            in_specs.append(pl.BlockSpec((1, bn), lambda j, i: (0, j)))
            operands.append(b2d)
        o_spec = pl.BlockSpec((bm, bn), lambda j, i: (i, j))
        kernel = partial(_ws_kernel, has_bias=has_bias)
        scratch = []
        vmem_need = ws_need
        dims = ("parallel", "parallel")
    else:
        # K-streamed 3-D grid; reduction axis last + "arbitrary".
        bk = min(tk, K_full)
        K_pad = _round_up(K, bk)
        x_p = _pad2d(x2d, M_pad, K_pad)
        w_p = _pad2d(weight_kn, K_pad, N_pad)
        grid = (M_pad // bm, N_pad // bn, K_pad // bk)
        in_specs = [pl.BlockSpec((bm, bk), lambda i, j, k: (i, k)),
                    pl.BlockSpec((bk, bn), lambda i, j, k: (k, j))]
        operands = [x_p, w_p]
        if has_bias:
            in_specs.append(pl.BlockSpec((1, bn), lambda i, j, k: (0, j)))
            operands.append(b2d)
        o_spec = pl.BlockSpec((bm, bn), lambda i, j, k: (i, j))
        use_scratch = out_dtype != np.dtype(np.float32)
        scratch = [pltpu.VMEM((bm, bn), jnp.float32)] if use_scratch else []
        kernel = partial(_kstream_kernel, has_bias=has_bias,
                         use_scratch=use_scratch)
        vmem_need = (2 * bm * bk * in_bytes + 2 * bk * bn * in_bytes
                     + 2 * bm * bn * out_bytes
                     + (bm * bn * 4 if use_scratch else 0)
                     + 8 * bn * 4)
        dims = ("parallel", "parallel", "arbitrary")

    # Explicit scoped-VMEM limit sized to the chosen tiles (+ headroom),
    # clamped to 64 MiB so a v6e-tuned config cannot overrun v7x's VMEM.
    vmem_limit = int(min(max(int(vmem_need * 1.25) + (4 << 20), 32 << 20),
                         64 << 20))

    out2d = pl.pallas_call(
        kernel,
        out_shape=jax.ShapeDtypeStruct((M_pad, N_pad), out_dtype),
        grid_spec=pltpu.PrefetchScalarGridSpec(
            num_scalar_prefetch=0,
            grid=grid,
            in_specs=in_specs,
            out_specs=o_spec,
            scratch_shapes=scratch),
        compiler_params=pltpu.CompilerParams(
            dimension_semantics=dims,
            vmem_limit_bytes=vmem_limit),
    )(*operands)

    if M_pad != M or N_pad != N:
        out2d = out2d[:M, :N]
    # Head split is free reshape glue.
    return out2d.reshape(seq_len, batch, heads, d_k)


# ---------------------------------------------------------------------------
# Demo / correctness check
# ---------------------------------------------------------------------------
if __name__ == "__main__":
    seq_len, batch, d_model = 8, 2, 128
    heads, d_k = 4, 32
    n_out = heads * d_k

    key = jax.random.PRNGKey(0)
    kx, kw, kb = jax.random.split(key, 3)

    x = jax.random.normal(kx, (seq_len, batch, d_model), dtype=jnp.float32)

    # nn.Linear default init: U[-1/sqrt(in), 1/sqrt(in)], PyTorch (out, in) layout.
    bound = 1.0 / math.sqrt(d_model)
    weight = jax.random.uniform(kw, (n_out, d_model),
                                minval=-bound, maxval=bound, dtype=jnp.float32)
    bias = jax.random.uniform(kb, (n_out,),
                              minval=-bound, maxval=bound, dtype=jnp.float32)

    # Plain-JAX references.
    ref = (x.reshape(-1, d_model) @ weight.T + bias).reshape(
        seq_len, batch, heads, d_k)
    ref_nb = (x.reshape(-1, d_model) @ weight.T).reshape(
        seq_len, batch, heads, d_k)

    # 1) Default path: bf16 MXU feed (f32 accumulation), weight-stationary grid.
    w_kn_bf16, b_f32 = prepare_params(weight, bias, jnp.bfloat16)
    fwd = jax.jit(partial(prepare_for_mha, heads=heads, d_k=d_k))
    out = jax.block_until_ready(fwd(x, w_kn_bf16, b_f32))
    assert out.shape == (seq_len, batch, heads, d_k)
    assert jnp.allclose(out, ref, atol=3e-2, rtol=3e-2), "bf16 WS path mismatch"

    # 2) f32 MXU feed, tight tolerance vs reference.
    w_kn_f32, _ = prepare_params(weight, bias, None)
    fwd_f32 = jax.jit(partial(prepare_for_mha, heads=heads, d_k=d_k,
                              mxu_input_dtype=None))
    out_f32 = jax.block_until_ready(fwd_f32(x, w_kn_f32, b_f32))
    assert jnp.allclose(out_f32, ref, atol=1e-5, rtol=1e-5), "f32 WS path mismatch"

    # 3) Bias-free variant.
    out_nb = jax.block_until_ready(
        jax.jit(partial(prepare_for_mha, heads=heads, d_k=d_k,
                        mxu_input_dtype=None))(x, w_kn_f32, None))
    assert jnp.allclose(out_nb, ref_nb, atol=1e-5, rtol=1e-5), "no-bias mismatch"

    # 4) Force the K-streamed 3-D grid path (exercised for very large d_model).
    fwd_ks = jax.jit(partial(prepare_for_mha, heads=heads, d_k=d_k,
                             mxu_input_dtype=None, ws_vmem_budget=0))
    out_ks = jax.block_until_ready(fwd_ks(x, w_kn_f32, b_f32))
    assert jnp.allclose(out_ks, ref, atol=1e-5, rtol=1e-5), "K-stream mismatch"

    print("KERNEL_OK")
</pallas_src>

<mosaic_0001>
module attributes {stable_mosaic.version = 11 : i64} {
  func.func @_ws_kernel(%arg0: i32, %arg1: i32, %arg2: memref<16x128xbf16, #tpu.memory_space<vmem>>, %arg3: memref<128x128xbf16, #tpu.memory_space<vmem>>, %arg4: memref<1x128xf32, #tpu.memory_space<vmem>>, %arg5: memref<16x128xf32, #tpu.memory_space<vmem>>) attributes {dimension_semantics = [#tpu.dimension_semantics<parallel>, #tpu.dimension_semantics<parallel>], iteration_bounds = array<i64: 1, 1>, scalar_prefetch = 0 : i64, scratch_operands = 0 : i64, tpu.core_type = #tpu.core_type<tc>, window_params = [{transform_indices = @transform_0, window_bounds = array<i64: 16, 128>}, {transform_indices = @transform_1, window_bounds = array<i64: 128, 128>}, {transform_indices = @transform_2, window_bounds = array<i64: 1, 128>}, {transform_indices = @transform_3, window_bounds = array<i64: 16, 128>}]} {
    %c0 = arith.constant 0 : index
    %c0_0 = arith.constant 0 : index
    %0 = vector.load %arg2[%c0, %c0_0] : memref<16x128xbf16, #tpu.memory_space<vmem>>, vector<16x128xbf16>
    %c0_1 = arith.constant 0 : index
    %c0_2 = arith.constant 0 : index
    %1 = vector.load %arg3[%c0_1, %c0_2] : memref<128x128xbf16, #tpu.memory_space<vmem>>, vector<128x128xbf16>
    %cst = arith.constant dense<0.000000e+00> : vector<16x128xf32>
    %2 = tpu.matmul %0, %1, %cst {dimension_numbers = #tpu.dot_dimension_numbers<[1], [0], [0], [1], [0, 0, 1, 1], [], []>} : vector<16x128xbf16>, vector<128x128xbf16>, vector<16x128xf32> -> vector<16x128xf32>
    %c0_3 = arith.constant 0 : index
    %c0_4 = arith.constant 0 : index
    %3 = vector.load %arg4[%c0_3, %c0_4] : memref<1x128xf32, #tpu.memory_space<vmem>>, vector<1x128xf32>
    %4 = vector.broadcast %3 : vector<1x128xf32> to vector<16x128xf32>
    %5 = arith.addf %2, %4 : vector<16x128xf32>
    %c0_5 = arith.constant 0 : index
    %c0_6 = arith.constant 0 : index
    %6 = vector.load %arg5[%c0_5, %c0_6] : memref<16x128xf32, #tpu.memory_space<vmem>>, vector<16x128xf32>
    tpu.vector_store %arg5[%c0_5, %c0_6], %5 {strides = array<i32>} : memref<16x128xf32, #tpu.memory_space<vmem>>, vector<16x128xf32>,
    return
  }
  func.func @transform_0(%arg0: i32, %arg1: i32) -> (i32, i32) {
    %c0_i32 = arith.constant 0 : i32
    %c0_i32_0 = arith.constant 0 : i32
    return %arg1, %c0_i32 : i32, i32
  }
  func.func @transform_1(%arg0: i32, %arg1: i32) -> (i32, i32) {
    %c0_i32 = arith.constant 0 : i32
    %c0_i32_0 = arith.constant 0 : i32
    return %c0_i32, %arg0 : i32, i32
  }
  func.func @transform_2(%arg0: i32, %arg1: i32) -> (i32, i32) {
    %c0_i32 = arith.constant 0 : i32
    %c0_i32_0 = arith.constant 0 : i32
    return %c0_i32, %arg0 : i32, i32
  }
  func.func @transform_3(%arg0: i32, %arg1: i32) -> (i32, i32) {
    %c0_i32 = arith.constant 0 : i32
    return %arg1, %arg0 : i32, i32
  }
}

</mosaic_0001>

<llo_original>
// kernel: prepare_for_mha.1
$region0: #{prepare_for_mha.1}
  #allocation0 [shape = 'u32[]', space=smem, size = 0x4, offset = 0x4, fixed_abs, tag = 'smem constant byte address 0x4 - core index']
  #allocation1 [shape = 'u32[144,128]{1,0:T(1,128)}', space=vmem, size = 0x12000, scoped, tag = 'internal scratch']
  %s0 = inlined_call_operand.vmem [shape: bf16[16,128], index: 0, kind: input, shape index: {}]
  %s1 = inlined_call_operand.hbm [shape: bf16[128,128], index: 1, kind: input, shape index: {}]
  %s2 = inlined_call_operand.vmem [shape: f32[1,128], index: 2, kind: input, shape index: {}]
  %s3 = inlined_call_operand.vmem [shape: f32[16,128], index: 3, kind: output, shape index: {}]
  %s4 = sld [smem:[#allocation0]]
  $region26: #{prepare_for_mha.1} parent=0
    _
  %s6 = ssub.s32 1, %s4
  %s7 = scalar_select 0, %s6, %s4
  $region1: #{prepare_for_mha.1} parent=0
    #allocation2 [shape = 'u8[32768]{0}', space=vmem, size = 0x8000, scoped, tag = 'input window, operand 1, single buffered']
    #allocation3 [shape = 's32[1]{0}', space=sflag, size = 0x4, scoped, tag = 'scoped memory for prepare_for_mha.1']
    %8 = vsyncpa [#allocation3], 0
    // Predicated region
    $region2: #{prepare_for_mha.1} parent=1 // pred_check
      _
    $region3: #{prepare_for_mha.1} parent=1 // pred_check_branch
      %10 = sbr.rel (0) target = $region5
    $region4: #{prepare_for_mha.1} parent=1 // pred_region
      _
    $region5: #{prepare_for_mha.1} parent=1 // pred_fallthru
      _
    // Predicated region
    $region6: #{prepare_for_mha.1} parent=1 // pred_check
      _
    $region7: #{prepare_for_mha.1} parent=1 // pred_check_branch
      %12 = sbr.rel (0) target = $region9
    $region8: #{prepare_for_mha.1} parent=1 // pred_region
      %s14 = ssub.s32 1024, 1024
      %15 = vsyncadd [#allocation3], %s14
      %s16 = sshll.u32 [#allocation2], 4
      %s17 = int_to_ptr.vmem [resolvable:$true] %s16
      %22 = dma.hbm_to_vmem [thread:$0]  %s1, 1024, %s17, [#allocation3], 64, 64, 4
    $region9: #{prepare_for_mha.1} parent=1 // pred_fallthru
      _
    // Predicated region
    $region10: #{prepare_for_mha.1} parent=1 // pred_check
      _
    $region11: #{prepare_for_mha.1} parent=1 // pred_check_branch
      %24 = sbr.rel (0) target = $region13
    $region12: #{prepare_for_mha.1} parent=1 // pred_region
      _
    $region13: #{prepare_for_mha.1} parent=1 // pred_fallthru
      _
    // Predicated region
    $region14: #{prepare_for_mha.1} parent=1 // pred_check
      _
    $region15: #{prepare_for_mha.1} parent=1 // pred_check_branch
      %26 = sbr.rel (0) target = $region17
    $region16: #{prepare_for_mha.1} parent=1 // pred_region
      %27 = dma.done [#allocation3], 1024
    $region17: #{prepare_for_mha.1} parent=1 // pred_fallthru
      _
    %v29 = vld [vmem:[%s0] sm:$0xf]
    %v30 = vld [vmem:[%s0 + $0x4] sm:$0xf]
    %v31 = vld [vmem:[#allocation2] sm:$0xf]
    %v32 = vld [vmem:[#allocation2 + $0x4] sm:$0xf]
    %v33 = vld [vmem:[#allocation2 + $0x8] sm:$0xf]
    %v34 = vld [vmem:[#allocation2 + $0xc] sm:$0xf]
    %v35 = vld [vmem:[#allocation2 + $0x10] sm:$0xf]
    %v36 = vld [vmem:[#allocation2 + $0x14] sm:$0xf]
    %v37 = vld [vmem:[#allocation2 + $0x18] sm:$0xf]
    %v38 = vld [vmem:[#allocation2 + $0x1c] sm:$0xf]
    %v39 = vld [vmem:[#allocation2 + $0x20] sm:$0xf]
    %v40 = vld [vmem:[#allocation2 + $0x24] sm:$0xf]
    %v41 = vld [vmem:[#allocation2 + $0x28] sm:$0xf]
    %v42 = vld [vmem:[#allocation2 + $0x2c] sm:$0xf]
    %v43 = vld [vmem:[#allocation2 + $0x30] sm:$0xf]
    %v44 = vld [vmem:[#allocation2 + $0x34] sm:$0xf]
    %v45 = vld [vmem:[#allocation2 + $0x38] sm:$0xf]
    %v46 = vld [vmem:[#allocation2 + $0x3c] sm:$0xf]
    %v47 = vld [vmem:[%s2] sm:$0x1]
    %v49 = vlaneseq
    %v50 = vshrl.u32 %v49, 7
    %v51 = vsub.s32 0, %v50
    %v52 = vrot.slane %v47, %v51
    %v56 = vunpack.c.l.b16 %v29
    %v57 = vunpack.c.l.b16 %v30
    %v58 = vpack.c.b16 %v57, %v56
    %v76 = vunpack.c.l.b16 %v31
    %v77 = vunpack.c.l.b16 %v32
    %v78 = vunpack.c.l.b16 %v33
    %v79 = vunpack.c.l.b16 %v34
    %v80 = vunpack.c.l.b16 %v35
    %v81 = vunpack.c.l.b16 %v36
    %v82 = vunpack.c.l.b16 %v37
    %v83 = vunpack.c.l.b16 %v38
    %v84 = vunpack.c.l.b16 %v39
    %v85 = vunpack.c.l.b16 %v40
    %v86 = vunpack.c.l.b16 %v41
    %v87 = vunpack.c.l.b16 %v42
    %v88 = vunpack.c.l.b16 %v43
    %v89 = vunpack.c.l.b16 %v44
    %v90 = vunpack.c.l.b16 %v45
    %v91 = vunpack.c.l.b16 %v46
    %v92 = vpack.c.b16 %v77, %v76
    %v93 = vpack.c.b16 %v79, %v78
    %v94 = vpack.c.b16 %v81, %v80
    %v95 = vpack.c.b16 %v83, %v82
    %v96 = vpack.c.b16 %v85, %v84
    %v97 = vpack.c.b16 %v87, %v86
    %v98 = vpack.c.b16 %v89, %v88
    %v99 = vpack.c.b16 %v91, %v90
    %108 = vmatprep.subr.bf16.mxu0 0
    %109 = vmatpush1.bf16.msra.mxu0 %v99
    %110 = vmatprep.subr.bf16.mxu0 0
    %111 = vmatpush1.bf16.msra.mxu0 %v98
    %112 = vmatprep.subr.bf16.mxu0 0
    %113 = vmatpush1.bf16.msra.mxu0 %v97
    %114 = vmatprep.subr.bf16.mxu0 0
    %115 = vmatpush1.bf16.msra.mxu0 %v96
    %116 = vmatprep.subr.bf16.mxu0 0
    %117 = vmatpush1.bf16.msra.mxu0 %v95
    %118 = vmatprep.subr.bf16.mxu0 0
    %119 = vmatpush1.bf16.msra.mxu0 %v94
    %120 = vmatprep.subr.bf16.mxu0 0
    %121 = vmatpush1.bf16.msra.mxu0 %v93
    %122 = vmatprep.subr.bf16.mxu0 0
    %123 = vmatpush1.bf16.msra.mxu0 %v92
    %124 = vmatprep.subr.bf16.mxu0 0
    %125 = vmatpush2.bf16.msra.mxu0 0
    %126 = vmatprep.subr.bf16.mxu0 0
    %127 = vmatpush2.bf16.msra.mxu0 0
    %128 = vmatprep.subr.bf16.mxu0 0
    %129 = vmatpush2.bf16.msra.mxu0 0
    %130 = vmatprep.subr.bf16.mxu0 0
    %131 = vmatpush2.bf16.msra.mxu0 0
    %132 = vmatprep.subr.bf16.mxu0 0
    %133 = vmatpush2.bf16.msra.mxu0 0
    %134 = vmatprep.subr.bf16.mxu0 0
    %135 = vmatpush2.bf16.msra.mxu0 0
    %136 = vmatprep.subr.bf16.mxu0 0
    %137 = vmatpush2.bf16.msra.mxu0 0
    %138 = vmatprep.subr.bf16.mxu0 0
    %139 = vmatpush2.bf16.msra.mxu0 0
    %140 = vmatprep.mubr.bf16.mxu0 0
    %141 = vmatmul.mubr.bf16.gmra.mxu0 %v58
    %v142 = vpop.f32.mrf.mxu0
    %v143 = vadd.f32 %v52, %v142
    %v144 = vpop.f32.mrf.mxu0
    %v145 = vpop.f32.mrf.mxu0
    %v146 = vadd.f32 %v52, %v145
    %v147 = vpop.f32.mrf.mxu0
    %148 = vdwg.mxu0
    %149 = vst [vmem:[%s3] sm:$0xff] %v143
    %150 = vst [vmem:[%s3 + $0x8] sm:$0xff] %v146
    // Predicated region
    $region18: #{prepare_for_mha.1} parent=1 // pred_check
      _
    $region19: #{prepare_for_mha.1} parent=1 // pred_check_branch
      %152 = sbr.rel (0) target = $region21
    $region20: #{prepare_for_mha.1} parent=1 // pred_region
      _
    $region21: #{prepare_for_mha.1} parent=1 // pred_fallthru
      _
    // Predicated region
    $region22: #{prepare_for_mha.1} parent=1 // pred_check
      _
    $region23: #{prepare_for_mha.1} parent=1 // pred_check_branch
      %154 = sbr.rel (0) target = $region25
    $region24: #{prepare_for_mha.1} parent=1 // pred_region
      _
    $region25: #{prepare_for_mha.1} parent=1 // pred_fallthru
      _
    %155 = vsyncpa [#allocation3], 1

</llo_original>
